<compile_context>
chip_gen: v5e
topology: v5e:2x2
jax: 0.10.0
libtpu: 0.0.40
codegen_flags: <defaults>
</compile_context>

<pallas_src>
import functools
import math

import jax
import jax.numpy as jnp
from jax import lax
from jax.experimental import pallas as pl
from jax.experimental.pallas import tpu as pltpu


def _better_attention_kernel(n_partitions, embed_dim, eps,
                             x_ref, wqkv_ref, bqkv_ref, o_ref):
    """Processes one (in_size, TB) tile; the batch lives in the lane dim."""
    P, E = n_partitions, embed_dim
    F = P * E                                          # in_size

    x = x_ref[...].astype(jnp.float32)                 # (F, TB)

    # ---- LayerNorm standardization over the feature (sublane) axis ----------
    # (gamma/beta are folded into the fused QKV weight/bias in the wrapper.)
    mean = jnp.mean(x, axis=0, keepdims=True)                        # (1, TB)
    var = jnp.mean(jnp.square(x - mean), axis=0, keepdims=True)      # (1, TB)
    xn = (x - mean) * lax.rsqrt(var + eps)                           # (F, TB)

    # ---- fused LN-affine + Q|K|V projection: ONE MXU matmul -----------------
    # wqkv = [kron(I_P, Wq)/sqrt(E); kron(I_P, Wk); kron(I_P, Wv)] * gamma_col
    qkv = jnp.dot(wqkv_ref[...], xn, preferred_element_type=jnp.float32)
    qkv = qkv + bqkv_ref[...]                          # (3F, TB), lane bcast
    q = qkv[0:F, :]
    k = qkv[F:2 * F, :]
    v = qkv[2 * F:3 * F, :]

    # ---- per-sample attention scores (batch stays in lanes) -----------------
    # s[p][c][0, b] == (Q_b K_b^T)[p, c] / sqrt(E)   (scale already folded in)
    s = [[jnp.sum(q[p * E:(p + 1) * E, :] * k[c * E:(c + 1) * E, :],
                  axis=0, keepdims=True)               # (1, TB)
          for c in range(P)]
         for p in range(P)]

    # ---- softmax over dim=1 of the (B, P, P) score tensor (i.e. over p) -----
    a = [[None] * P for _ in range(P)]
    for c in range(P):
        col_max = s[0][c]
        for p in range(1, P):
            col_max = jnp.maximum(col_max, s[p][c])
        exps = [jnp.exp(s[p][c] - col_max) for p in range(P)]
        denom = exps[0]
        for p in range(1, P):
            denom = denom + exps[p]
        inv = pl.reciprocal(denom, approx=True)        # EUP rcp (free slot)
        inv = inv * (2.0 - denom * inv)                # one Newton polish step
        for p in range(P):
            a[p][c] = exps[p] * inv

    # ---- prod = softmax(S) @ V, then residual with the *raw* input ----------
    rows = []
    for p in range(P):
        acc = a[p][0] * v[0:E, :]                      # (1,TB)*(E,TB) bcast
        for c in range(1, P):
            acc = acc + a[p][c] * v[c * E:(c + 1) * E, :]
        rows.append(acc)                               # (E, TB)
    prod = jnp.concatenate(rows, axis=0)               # (F, TB)

    o_ref[...] = (prod + x).astype(o_ref.dtype)


def _choose_tile_b(B, block_batch):
    """Pick a lane-dense batch tile (multiple of 128) that divides B.

    Prefers >= 2 grid steps when possible so both v7x TensorCores get work;
    falls back to the whole batch in one step for small / awkward B.
    """
    best = None
    t = 128
    while t <= B and t <= block_batch:
        if B % t == 0:
            best = t
        t *= 2
    if best is not None and B // best == 1 and B % 256 == 0:
        best = B // 2            # keep the grid even for v7x's 2 TensorCores
    return best if best is not None else B


def better_attention(x, params, n_partitions, block_batch=8192):
    B, in_size = x.shape
    P = n_partitions
    E = in_size // P
    assert P * E == in_size
    scale = math.sqrt(E)
    eps = 1e-5

    TB = _choose_tile_b(B, block_batch)
    assert B % TB == 0

    # ---- wrapper-side layout plumbing (lane-dense kernel operands) ----------
    xT = x.T                                           # (in_size, B)
    ln_w = params['ln_w'].astype(jnp.float32)
    ln_b = params['ln_b'].astype(jnp.float32)

    eye_p = jnp.eye(P, dtype=jnp.float32)
    a_q = jnp.kron(eye_p, params['wq']) / scale        # fold 1/sqrt(E) into Q
    a_k = jnp.kron(eye_p, params['wk'])
    a_v = jnp.kron(eye_p, params['wv'])
    w_qkv = jnp.concatenate([a_q, a_k, a_v], axis=0)   # (3*in_size, in_size)
    b_qkv = jnp.concatenate([jnp.tile(params['bq'], P) / scale,
                             jnp.tile(params['bk'], P),
                             jnp.tile(params['bv'], P)]).reshape(3 * in_size, 1)

    # Fold LayerNorm gamma/beta into the fused projection:
    #   W @ (xn*gamma + beta) == (W*gamma_row) @ xn + (W @ beta)
    w_qkv = w_qkv * ln_w[None, :]                      # scale columns by gamma
    b_qkv = b_qkv + w_qkv @ (ln_b / ln_w).reshape(in_size, 1) \
        if False else b_qkv + jnp.concatenate([a_q, a_k, a_v], axis=0) @ ln_b.reshape(in_size, 1)

    kernel = functools.partial(_better_attention_kernel, P, E, eps)
    const2d = lambda i: (0, 0)

    grid_spec = pltpu.PrefetchScalarGridSpec(
        num_scalar_prefetch=0,
        grid=(B // TB,),
        in_specs=[
            pl.BlockSpec((in_size, TB), lambda i: (0, i)),     # x, batch in lanes
            pl.BlockSpec((3 * in_size, in_size), const2d),     # fused QKV weight
            pl.BlockSpec((3 * in_size, 1), const2d),           # fused QKV bias
        ],
        out_specs=pl.BlockSpec((in_size, TB), lambda i: (0, i)),
    )

    outT = pl.pallas_call(
        kernel,
        out_shape=jax.ShapeDtypeStruct((in_size, B), x.dtype),
        grid_spec=grid_spec,
        compiler_params=pltpu.CompilerParams(
            dimension_semantics=("parallel",)),
    )(xT, w_qkv, b_qkv)

    return outT.T                                       # back to (B, in_size)


def better_attention_reference(x, params, n_partitions):
    """Pure-JAX reference mirroring the PyTorch forward exactly."""
    B, D = x.shape
    P = n_partitions
    E = D // P
    mean = jnp.mean(x, axis=-1, keepdims=True)
    var = jnp.mean(jnp.square(x - mean), axis=-1, keepdims=True)
    xn = (x - mean) / jnp.sqrt(var + 1e-5) * params['ln_w'] + params['ln_b']
    _x = xn.reshape(B, P, E)
    q = _x @ params['wq'].T + params['bq']
    k = _x @ params['wk'].T + params['bk']
    v = _x @ params['wv'].T + params['bv']
    s = jnp.einsum('bpe,bqe->bpq', q, k) / math.sqrt(E)
    a = jax.nn.softmax(s, axis=1)          # dim=1, as in the module
    prod = jnp.einsum('bpq,bqe->bpe', a, v)
    return prod.reshape(B, D) + x


def init_params(key, in_size, n_partitions):
    E = in_size // n_partitions
    ks = jax.random.split(key, 8)
    bound = 1.0 / math.sqrt(E)
    return {
        # non-trivial gamma/beta so the LN-affine fold is actually exercised
        'ln_w': 1.0 + 0.1 * jax.random.normal(ks[6], (in_size,), jnp.float32),
        'ln_b': 0.1 * jax.random.normal(ks[7], (in_size,), jnp.float32),
        'wq': jax.random.uniform(ks[0], (E, E), jnp.float32, -bound, bound),
        'bq': jax.random.uniform(ks[1], (E,), jnp.float32, -bound, bound),
        'wk': jax.random.uniform(ks[2], (E, E), jnp.float32, -bound, bound),
        'bk': jax.random.uniform(ks[3], (E,), jnp.float32, -bound, bound),
        'wv': jax.random.uniform(ks[4], (E, E), jnp.float32, -bound, bound),
        'bv': jax.random.uniform(ks[5], (E,), jnp.float32, -bound, bound),
    }


if __name__ == "__main__":
    B = 512                              # matches the module's batch_size
    n_partitions = 4
    embed_dim = 8
    in_size = n_partitions * embed_dim   # 32

    key = jax.random.PRNGKey(0)
    kx, kp = jax.random.split(key)
    x = jax.random.normal(kx, (B, in_size), jnp.float32)
    params = init_params(kp, in_size, n_partitions)

    fn = jax.jit(lambda xx, pp: better_attention(xx, pp, n_partitions))
    out = fn(x, params)
    out = jax.block_until_ready(out)

    ref = better_attention_reference(x, params, n_partitions)
    ref = jax.block_until_ready(ref)

    assert out.shape == (B, in_size)
    err = float(jnp.max(jnp.abs(out - ref)))
    assert err < 2e-4, f"mismatch vs reference: max abs err = {err}"
    print("KERNEL_OK")
</pallas_src>

<mosaic_0001>
module attributes {stable_mosaic.version = 11 : i64} {
  func.func @_better_attention_kernel(%arg0: i32, %arg1: memref<32x256xf32, #tpu.memory_space<vmem>>, %arg2: memref<96x32xf32, #tpu.memory_space<vmem>>, %arg3: memref<96x1xf32, #tpu.memory_space<vmem>>, %arg4: memref<32x256xf32, #tpu.memory_space<vmem>>) attributes {dimension_semantics = [#tpu.dimension_semantics<parallel>], iteration_bounds = array<i64: 2>, scalar_prefetch = 0 : i64, scratch_operands = 0 : i64, tpu.core_type = #tpu.core_type<tc>, window_params = [{transform_indices = @transform_0, window_bounds = array<i64: 32, 256>}, {pipeline_mode = #tpu.pipeline_mode<synchronous>, transform_indices = @transform_1, window_bounds = array<i64: 96, 32>}, {pipeline_mode = #tpu.pipeline_mode<synchronous>, transform_indices = @transform_2, window_bounds = array<i64: 96, 1>}, {transform_indices = @transform_3, window_bounds = array<i64: 32, 256>}]} {
    %c0 = arith.constant 0 : index
    %c0_0 = arith.constant 0 : index
    %0 = vector.load %arg1[%c0, %c0_0] : memref<32x256xf32, #tpu.memory_space<vmem>>, vector<32x256xf32>
    %cst = arith.constant dense<0.000000e+00> : vector<256xf32>
    %1 = vector.multi_reduction <add>, %0, %cst [0] : vector<32x256xf32> to vector<256xf32>
    %2 = vector.shape_cast %1 : vector<256xf32> to vector<1x256xf32>
    %cst_1 = arith.constant 3.200000e+01 : f32
    %3 = vector.broadcast %cst_1 : f32 to vector<1x256xf32>
    %4 = arith.divf %2, %3 : vector<1x256xf32>
    %5 = vector.broadcast %4 : vector<1x256xf32> to vector<32x256xf32>
    %6 = arith.subf %0, %5 : vector<32x256xf32>
    %7 = arith.mulf %6, %6 : vector<32x256xf32>
    %cst_2 = arith.constant dense<0.000000e+00> : vector<256xf32>
    %8 = vector.multi_reduction <add>, %7, %cst_2 [0] : vector<32x256xf32> to vector<256xf32>
    %9 = vector.shape_cast %8 : vector<256xf32> to vector<1x256xf32>
    %cst_3 = arith.constant 3.200000e+01 : f32
    %10 = vector.broadcast %cst_3 : f32 to vector<1x256xf32>
    %11 = arith.divf %9, %10 : vector<1x256xf32>
    %12 = vector.broadcast %4 : vector<1x256xf32> to vector<32x256xf32>
    %13 = arith.subf %0, %12 : vector<32x256xf32>
    %cst_4 = arith.constant 9.99999974E-6 : f32
    %14 = vector.broadcast %cst_4 : f32 to vector<1x256xf32>
    %15 = arith.addf %11, %14 : vector<1x256xf32>
    %16 = math.rsqrt %15 : vector<1x256xf32>
    %17 = vector.broadcast %16 : vector<1x256xf32> to vector<32x256xf32>
    %18 = arith.mulf %13, %17 : vector<32x256xf32>
    %c0_5 = arith.constant 0 : index
    %c0_6 = arith.constant 0 : index
    %19 = vector.load %arg2[%c0_5, %c0_6] : memref<96x32xf32, #tpu.memory_space<vmem>>, vector<96x32xf32>
    %cst_7 = arith.constant dense<0.000000e+00> : vector<96x256xf32>
    %20 = tpu.matmul %19, %18, %cst_7 {dimension_numbers = #tpu.dot_dimension_numbers<[1], [0], [0], [1], [0, 0, 1, 1], [], []>} : vector<96x32xf32>, vector<32x256xf32>, vector<96x256xf32> -> vector<96x256xf32>
    %c0_8 = arith.constant 0 : index
    %c0_9 = arith.constant 0 : index
    %21 = vector.load %arg3[%c0_8, %c0_9] : memref<96x1xf32, #tpu.memory_space<vmem>>, vector<96x1xf32>
    %22 = vector.broadcast %21 : vector<96x1xf32> to vector<96x256xf32>
    %23 = arith.addf %20, %22 : vector<96x256xf32>
    %24 = vector.extract_strided_slice %23 {offsets = [0, 0], sizes = [32, 256], strides = [1, 1]} : vector<96x256xf32> to vector<32x256xf32>
    %25 = vector.extract_strided_slice %23 {offsets = [32, 0], sizes = [32, 256], strides = [1, 1]} : vector<96x256xf32> to vector<32x256xf32>
    %26 = vector.extract_strided_slice %23 {offsets = [64, 0], sizes = [32, 256], strides = [1, 1]} : vector<96x256xf32> to vector<32x256xf32>
    %27 = vector.extract_strided_slice %24 {offsets = [0, 0], sizes = [8, 256], strides = [1, 1]} : vector<32x256xf32> to vector<8x256xf32>
    %28 = vector.extract_strided_slice %25 {offsets = [0, 0], sizes = [8, 256], strides = [1, 1]} : vector<32x256xf32> to vector<8x256xf32>
    %29 = arith.mulf %27, %28 : vector<8x256xf32>
    %cst_10 = arith.constant dense<0.000000e+00> : vector<256xf32>
    %30 = vector.multi_reduction <add>, %29, %cst_10 [0] : vector<8x256xf32> to vector<256xf32>
    %31 = vector.shape_cast %30 : vector<256xf32> to vector<1x256xf32>
    %32 = vector.extract_strided_slice %24 {offsets = [0, 0], sizes = [8, 256], strides = [1, 1]} : vector<32x256xf32> to vector<8x256xf32>
    %33 = vector.extract_strided_slice %25 {offsets = [8, 0], sizes = [8, 256], strides = [1, 1]} : vector<32x256xf32> to vector<8x256xf32>
    %34 = arith.mulf %32, %33 : vector<8x256xf32>
    %cst_11 = arith.constant dense<0.000000e+00> : vector<256xf32>
    %35 = vector.multi_reduction <add>, %34, %cst_11 [0] : vector<8x256xf32> to vector<256xf32>
    %36 = vector.shape_cast %35 : vector<256xf32> to vector<1x256xf32>
    %37 = vector.extract_strided_slice %24 {offsets = [0, 0], sizes = [8, 256], strides = [1, 1]} : vector<32x256xf32> to vector<8x256xf32>
    %38 = vector.extract_strided_slice %25 {offsets = [16, 0], sizes = [8, 256], strides = [1, 1]} : vector<32x256xf32> to vector<8x256xf32>
    %39 = arith.mulf %37, %38 : vector<8x256xf32>
    %cst_12 = arith.constant dense<0.000000e+00> : vector<256xf32>
    %40 = vector.multi_reduction <add>, %39, %cst_12 [0] : vector<8x256xf32> to vector<256xf32>
    %41 = vector.shape_cast %40 : vector<256xf32> to vector<1x256xf32>
    %42 = vector.extract_strided_slice %24 {offsets = [0, 0], sizes = [8, 256], strides = [1, 1]} : vector<32x256xf32> to vector<8x256xf32>
    %43 = vector.extract_strided_slice %25 {offsets = [24, 0], sizes = [8, 256], strides = [1, 1]} : vector<32x256xf32> to vector<8x256xf32>
    %44 = arith.mulf %42, %43 : vector<8x256xf32>
    %cst_13 = arith.constant dense<0.000000e+00> : vector<256xf32>
    %45 = vector.multi_reduction <add>, %44, %cst_13 [0] : vector<8x256xf32> to vector<256xf32>
    %46 = vector.shape_cast %45 : vector<256xf32> to vector<1x256xf32>
    %47 = vector.extract_strided_slice %24 {offsets = [8, 0], sizes = [8, 256], strides = [1, 1]} : vector<32x256xf32> to vector<8x256xf32>
    %48 = vector.extract_strided_slice %25 {offsets = [0, 0], sizes = [8, 256], strides = [1, 1]} : vector<32x256xf32> to vector<8x256xf32>
    %49 = arith.mulf %47, %48 : vector<8x256xf32>
    %cst_14 = arith.constant dense<0.000000e+00> : vector<256xf32>
    %50 = vector.multi_reduction <add>, %49, %cst_14 [0] : vector<8x256xf32> to vector<256xf32>
    %51 = vector.shape_cast %50 : vector<256xf32> to vector<1x256xf32>
    %52 = vector.extract_strided_slice %24 {offsets = [8, 0], sizes = [8, 256], strides = [1, 1]} : vector<32x256xf32> to vector<8x256xf32>
    %53 = vector.extract_strided_slice %25 {offsets = [8, 0], sizes = [8, 256], strides = [1, 1]} : vector<32x256xf32> to vector<8x256xf32>
    %54 = arith.mulf %52, %53 : vector<8x256xf32>
    %cst_15 = arith.constant dense<0.000000e+00> : vector<256xf32>
    %55 = vector.multi_reduction <add>, %54, %cst_15 [0] : vector<8x256xf32> to vector<256xf32>
    %56 = vector.shape_cast %55 : vector<256xf32> to vector<1x256xf32>
    %57 = vector.extract_strided_slice %24 {offsets = [8, 0], sizes = [8, 256], strides = [1, 1]} : vector<32x256xf32> to vector<8x256xf32>
    %58 = vector.extract_strided_slice %25 {offsets = [16, 0], sizes = [8, 256], strides = [1, 1]} : vector<32x256xf32> to vector<8x256xf32>
    %59 = arith.mulf %57, %58 : vector<8x256xf32>
    %cst_16 = arith.constant dense<0.000000e+00> : vector<256xf32>
    %60 = vector.multi_reduction <add>, %59, %cst_16 [0] : vector<8x256xf32> to vector<256xf32>
    %61 = vector.shape_cast %60 : vector<256xf32> to vector<1x256xf32>
    %62 = vector.extract_strided_slice %24 {offsets = [8, 0], sizes = [8, 256], strides = [1, 1]} : vector<32x256xf32> to vector<8x256xf32>
    %63 = vector.extract_strided_slice %25 {offsets = [24, 0], sizes = [8, 256], strides = [1, 1]} : vector<32x256xf32> to vector<8x256xf32>
    %64 = arith.mulf %62, %63 : vector<8x256xf32>
    %cst_17 = arith.constant dense<0.000000e+00> : vector<256xf32>
    %65 = vector.multi_reduction <add>, %64, %cst_17 [0] : vector<8x256xf32> to vector<256xf32>
    %66 = vector.shape_cast %65 : vector<256xf32> to vector<1x256xf32>
    %67 = vector.extract_strided_slice %24 {offsets = [16, 0], sizes = [8, 256], strides = [1, 1]} : vector<32x256xf32> to vector<8x256xf32>
    %68 = vector.extract_strided_slice %25 {offsets = [0, 0], sizes = [8, 256], strides = [1, 1]} : vector<32x256xf32> to vector<8x256xf32>
    %69 = arith.mulf %67, %68 : vector<8x256xf32>
    %cst_18 = arith.constant dense<0.000000e+00> : vector<256xf32>
    %70 = vector.multi_reduction <add>, %69, %cst_18 [0] : vector<8x256xf32> to vector<256xf32>
    %71 = vector.shape_cast %70 : vector<256xf32> to vector<1x256xf32>
    %72 = vector.extract_strided_slice %24 {offsets = [16, 0], sizes = [8, 256], strides = [1, 1]} : vector<32x256xf32> to vector<8x256xf32>
    %73 = vector.extract_strided_slice %25 {offsets = [8, 0], sizes = [8, 256], strides = [1, 1]} : vector<32x256xf32> to vector<8x256xf32>
    %74 = arith.mulf %72, %73 : vector<8x256xf32>
    %cst_19 = arith.constant dense<0.000000e+00> : vector<256xf32>
    %75 = vector.multi_reduction <add>, %74, %cst_19 [0] : vector<8x256xf32> to vector<256xf32>
    %76 = vector.shape_cast %75 : vector<256xf32> to vector<1x256xf32>
    %77 = vector.extract_strided_slice %24 {offsets = [16, 0], sizes = [8, 256], strides = [1, 1]} : vector<32x256xf32> to vector<8x256xf32>
    %78 = vector.extract_strided_slice %25 {offsets = [16, 0], sizes = [8, 256], strides = [1, 1]} : vector<32x256xf32> to vector<8x256xf32>
    %79 = arith.mulf %77, %78 : vector<8x256xf32>
    %cst_20 = arith.constant dense<0.000000e+00> : vector<256xf32>
    %80 = vector.multi_reduction <add>, %79, %cst_20 [0] : vector<8x256xf32> to vector<256xf32>
    %81 = vector.shape_cast %80 : vector<256xf32> to vector<1x256xf32>
    %82 = vector.extract_strided_slice %24 {offsets = [16, 0], sizes = [8, 256], strides = [1, 1]} : vector<32x256xf32> to vector<8x256xf32>
    %83 = vector.extract_strided_slice %25 {offsets = [24, 0], sizes = [8, 256], strides = [1, 1]} : vector<32x256xf32> to vector<8x256xf32>
    %84 = arith.mulf %82, %83 : vector<8x256xf32>
    %cst_21 = arith.constant dense<0.000000e+00> : vector<256xf32>
    %85 = vector.multi_reduction <add>, %84, %cst_21 [0] : vector<8x256xf32> to vector<256xf32>
    %86 = vector.shape_cast %85 : vector<256xf32> to vector<1x256xf32>
    %87 = vector.extract_strided_slice %24 {offsets = [24, 0], sizes = [8, 256], strides = [1, 1]} : vector<32x256xf32> to vector<8x256xf32>
    %88 = vector.extract_strided_slice %25 {offsets = [0, 0], sizes = [8, 256], strides = [1, 1]} : vector<32x256xf32> to vector<8x256xf32>
    %89 = arith.mulf %87, %88 : vector<8x256xf32>
    %cst_22 = arith.constant dense<0.000000e+00> : vector<256xf32>
    %90 = vector.multi_reduction <add>, %89, %cst_22 [0] : vector<8x256xf32> to vector<256xf32>
    %91 = vector.shape_cast %90 : vector<256xf32> to vector<1x256xf32>
    %92 = vector.extract_strided_slice %24 {offsets = [24, 0], sizes = [8, 256], strides = [1, 1]} : vector<32x256xf32> to vector<8x256xf32>
    %93 = vector.extract_strided_slice %25 {offsets = [8, 0], sizes = [8, 256], strides = [1, 1]} : vector<32x256xf32> to vector<8x256xf32>
    %94 = arith.mulf %92, %93 : vector<8x256xf32>
    %cst_23 = arith.constant dense<0.000000e+00> : vector<256xf32>
    %95 = vector.multi_reduction <add>, %94, %cst_23 [0] : vector<8x256xf32> to vector<256xf32>
    %96 = vector.shape_cast %95 : vector<256xf32> to vector<1x256xf32>
    %97 = vector.extract_strided_slice %24 {offsets = [24, 0], sizes = [8, 256], strides = [1, 1]} : vector<32x256xf32> to vector<8x256xf32>
    %98 = vector.extract_strided_slice %25 {offsets = [16, 0], sizes = [8, 256], strides = [1, 1]} : vector<32x256xf32> to vector<8x256xf32>
    %99 = arith.mulf %97, %98 : vector<8x256xf32>
    %cst_24 = arith.constant dense<0.000000e+00> : vector<256xf32>
    %100 = vector.multi_reduction <add>, %99, %cst_24 [0] : vector<8x256xf32> to vector<256xf32>
    %101 = vector.shape_cast %100 : vector<256xf32> to vector<1x256xf32>
    %102 = vector.extract_strided_slice %24 {offsets = [24, 0], sizes = [8, 256], strides = [1, 1]} : vector<32x256xf32> to vector<8x256xf32>
    %103 = vector.extract_strided_slice %25 {offsets = [24, 0], sizes = [8, 256], strides = [1, 1]} : vector<32x256xf32> to vector<8x256xf32>
    %104 = arith.mulf %102, %103 : vector<8x256xf32>
    %cst_25 = arith.constant dense<0.000000e+00> : vector<256xf32>
    %105 = vector.multi_reduction <add>, %104, %cst_25 [0] : vector<8x256xf32> to vector<256xf32>
    %106 = vector.shape_cast %105 : vector<256xf32> to vector<1x256xf32>
    %107 = arith.maximumf %31, %51 : vector<1x256xf32>
    %108 = arith.maximumf %107, %71 : vector<1x256xf32>
    %109 = arith.maximumf %108, %91 : vector<1x256xf32>
    %110 = arith.subf %31, %109 : vector<1x256xf32>
    %111 = math.exp %110 : vector<1x256xf32>
    %112 = arith.subf %51, %109 : vector<1x256xf32>
    %113 = math.exp %112 : vector<1x256xf32>
    %114 = arith.subf %71, %109 : vector<1x256xf32>
    %115 = math.exp %114 : vector<1x256xf32>
    %116 = arith.subf %91, %109 : vector<1x256xf32>
    %117 = math.exp %116 : vector<1x256xf32>
    %118 = arith.addf %111, %113 : vector<1x256xf32>
    %119 = arith.addf %118, %115 : vector<1x256xf32>
    %120 = arith.addf %119, %117 : vector<1x256xf32>
    %121 = tpu.reciprocal %120 {approx = true} : vector<1x256xf32> -> vector<1x256xf32>
    %122 = arith.mulf %120, %121 : vector<1x256xf32>
    %cst_26 = arith.constant 2.000000e+00 : f32
    %123 = vector.broadcast %cst_26 : f32 to vector<1x256xf32>
    %124 = arith.subf %123, %122 : vector<1x256xf32>
    %125 = arith.mulf %121, %124 : vector<1x256xf32>
    %126 = arith.mulf %111, %125 : vector<1x256xf32>
    %127 = arith.mulf %113, %125 : vector<1x256xf32>
    %128 = arith.mulf %115, %125 : vector<1x256xf32>
    %129 = arith.mulf %117, %125 : vector<1x256xf32>
    %130 = arith.maximumf %36, %56 : vector<1x256xf32>
    %131 = arith.maximumf %130, %76 : vector<1x256xf32>
    %132 = arith.maximumf %131, %96 : vector<1x256xf32>
    %133 = arith.subf %36, %132 : vector<1x256xf32>
    %134 = math.exp %133 : vector<1x256xf32>
    %135 = arith.subf %56, %132 : vector<1x256xf32>
    %136 = math.exp %135 : vector<1x256xf32>
    %137 = arith.subf %76, %132 : vector<1x256xf32>
    %138 = math.exp %137 : vector<1x256xf32>
    %139 = arith.subf %96, %132 : vector<1x256xf32>
    %140 = math.exp %139 : vector<1x256xf32>
    %141 = arith.addf %134, %136 : vector<1x256xf32>
    %142 = arith.addf %141, %138 : vector<1x256xf32>
    %143 = arith.addf %142, %140 : vector<1x256xf32>
    %144 = tpu.reciprocal %143 {approx = true} : vector<1x256xf32> -> vector<1x256xf32>
    %145 = arith.mulf %143, %144 : vector<1x256xf32>
    %cst_27 = arith.constant 2.000000e+00 : f32
    %146 = vector.broadcast %cst_27 : f32 to vector<1x256xf32>
    %147 = arith.subf %146, %145 : vector<1x256xf32>
    %148 = arith.mulf %144, %147 : vector<1x256xf32>
    %149 = arith.mulf %134, %148 : vector<1x256xf32>
    %150 = arith.mulf %136, %148 : vector<1x256xf32>
    %151 = arith.mulf %138, %148 : vector<1x256xf32>
    %152 = arith.mulf %140, %148 : vector<1x256xf32>
    %153 = arith.maximumf %41, %61 : vector<1x256xf32>
    %154 = arith.maximumf %153, %81 : vector<1x256xf32>
    %155 = arith.maximumf %154, %101 : vector<1x256xf32>
    %156 = arith.subf %41, %155 : vector<1x256xf32>
    %157 = math.exp %156 : vector<1x256xf32>
    %158 = arith.subf %61, %155 : vector<1x256xf32>
    %159 = math.exp %158 : vector<1x256xf32>
    %160 = arith.subf %81, %155 : vector<1x256xf32>
    %161 = math.exp %160 : vector<1x256xf32>
    %162 = arith.subf %101, %155 : vector<1x256xf32>
    %163 = math.exp %162 : vector<1x256xf32>
    %164 = arith.addf %157, %159 : vector<1x256xf32>
    %165 = arith.addf %164, %161 : vector<1x256xf32>
    %166 = arith.addf %165, %163 : vector<1x256xf32>
    %167 = tpu.reciprocal %166 {approx = true} : vector<1x256xf32> -> vector<1x256xf32>
    %168 = arith.mulf %166, %167 : vector<1x256xf32>
    %cst_28 = arith.constant 2.000000e+00 : f32
    %169 = vector.broadcast %cst_28 : f32 to vector<1x256xf32>
    %170 = arith.subf %169, %168 : vector<1x256xf32>
    %171 = arith.mulf %167, %170 : vector<1x256xf32>
    %172 = arith.mulf %157, %171 : vector<1x256xf32>
    %173 = arith.mulf %159, %171 : vector<1x256xf32>
    %174 = arith.mulf %161, %171 : vector<1x256xf32>
    %175 = arith.mulf %163, %171 : vector<1x256xf32>
    %176 = arith.maximumf %46, %66 : vector<1x256xf32>
    %177 = arith.maximumf %176, %86 : vector<1x256xf32>
    %178 = arith.maximumf %177, %106 : vector<1x256xf32>
    %179 = arith.subf %46, %178 : vector<1x256xf32>
    %180 = math.exp %179 : vector<1x256xf32>
    %181 = arith.subf %66, %178 : vector<1x256xf32>
    %182 = math.exp %181 : vector<1x256xf32>
    %183 = arith.subf %86, %178 : vector<1x256xf32>
    %184 = math.exp %183 : vector<1x256xf32>
    %185 = arith.subf %106, %178 : vector<1x256xf32>
    %186 = math.exp %185 : vector<1x256xf32>
    %187 = arith.addf %180, %182 : vector<1x256xf32>
    %188 = arith.addf %187, %184 : vector<1x256xf32>
    %189 = arith.addf %188, %186 : vector<1x256xf32>
    %190 = tpu.reciprocal %189 {approx = true} : vector<1x256xf32> -> vector<1x256xf32>
    %191 = arith.mulf %189, %190 : vector<1x256xf32>
    %cst_29 = arith.constant 2.000000e+00 : f32
    %192 = vector.broadcast %cst_29 : f32 to vector<1x256xf32>
    %193 = arith.subf %192, %191 : vector<1x256xf32>
    %194 = arith.mulf %190, %193 : vector<1x256xf32>
    %195 = arith.mulf %180, %194 : vector<1x256xf32>
    %196 = arith.mulf %182, %194 : vector<1x256xf32>
    %197 = arith.mulf %184, %194 : vector<1x256xf32>
    %198 = arith.mulf %186, %194 : vector<1x256xf32>
    %199 = vector.extract_strided_slice %26 {offsets = [0, 0], sizes = [8, 256], strides = [1, 1]} : vector<32x256xf32> to vector<8x256xf32>
    %200 = vector.broadcast %126 : vector<1x256xf32> to vector<8x256xf32>
    %201 = arith.mulf %200, %199 : vector<8x256xf32>
    %202 = vector.extract_strided_slice %26 {offsets = [8, 0], sizes = [8, 256], strides = [1, 1]} : vector<32x256xf32> to vector<8x256xf32>
    %203 = vector.broadcast %149 : vector<1x256xf32> to vector<8x256xf32>
    %204 = arith.mulf %203, %202 : vector<8x256xf32>
    %205 = arith.addf %201, %204 : vector<8x256xf32>
    %206 = vector.extract_strided_slice %26 {offsets = [16, 0], sizes = [8, 256], strides = [1, 1]} : vector<32x256xf32> to vector<8x256xf32>
    %207 = vector.broadcast %172 : vector<1x256xf32> to vector<8x256xf32>
    %208 = arith.mulf %207, %206 : vector<8x256xf32>
    %209 = arith.addf %205, %208 : vector<8x256xf32>
    %210 = vector.extract_strided_slice %26 {offsets = [24, 0], sizes = [8, 256], strides = [1, 1]} : vector<32x256xf32> to vector<8x256xf32>
    %211 = vector.broadcast %195 : vector<1x256xf32> to vector<8x256xf32>
    %212 = arith.mulf %211, %210 : vector<8x256xf32>
    %213 = arith.addf %209, %212 : vector<8x256xf32>
    %214 = vector.extract_strided_slice %26 {offsets = [0, 0], sizes = [8, 256], strides = [1, 1]} : vector<32x256xf32> to vector<8x256xf32>
    %215 = vector.broadcast %127 : vector<1x256xf32> to vector<8x256xf32>
    %216 = arith.mulf %215, %214 : vector<8x256xf32>
    %217 = vector.extract_strided_slice %26 {offsets = [8, 0], sizes = [8, 256], strides = [1, 1]} : vector<32x256xf32> to vector<8x256xf32>
    %218 = vector.broadcast %150 : vector<1x256xf32> to vector<8x256xf32>
    %219 = arith.mulf %218, %217 : vector<8x256xf32>
    %220 = arith.addf %216, %219 : vector<8x256xf32>
    %221 = vector.extract_strided_slice %26 {offsets = [16, 0], sizes = [8, 256], strides = [1, 1]} : vector<32x256xf32> to vector<8x256xf32>
    %222 = vector.broadcast %173 : vector<1x256xf32> to vector<8x256xf32>
    %223 = arith.mulf %222, %221 : vector<8x256xf32>
    %224 = arith.addf %220, %223 : vector<8x256xf32>
    %225 = vector.extract_strided_slice %26 {offsets = [24, 0], sizes = [8, 256], strides = [1, 1]} : vector<32x256xf32> to vector<8x256xf32>
    %226 = vector.broadcast %196 : vector<1x256xf32> to vector<8x256xf32>
    %227 = arith.mulf %226, %225 : vector<8x256xf32>
    %228 = arith.addf %224, %227 : vector<8x256xf32>
    %229 = vector.extract_strided_slice %26 {offsets = [0, 0], sizes = [8, 256], strides = [1, 1]} : vector<32x256xf32> to vector<8x256xf32>
    %230 = vector.broadcast %128 : vector<1x256xf32> to vector<8x256xf32>
    %231 = arith.mulf %230, %229 : vector<8x256xf32>
    %232 = vector.extract_strided_slice %26 {offsets = [8, 0], sizes = [8, 256], strides = [1, 1]} : vector<32x256xf32> to vector<8x256xf32>
    %233 = vector.broadcast %151 : vector<1x256xf32> to vector<8x256xf32>
    %234 = arith.mulf %233, %232 : vector<8x256xf32>
    %235 = arith.addf %231, %234 : vector<8x256xf32>
    %236 = vector.extract_strided_slice %26 {offsets = [16, 0], sizes = [8, 256], strides = [1, 1]} : vector<32x256xf32> to vector<8x256xf32>
    %237 = vector.broadcast %174 : vector<1x256xf32> to vector<8x256xf32>
    %238 = arith.mulf %237, %236 : vector<8x256xf32>
    %239 = arith.addf %235, %238 : vector<8x256xf32>
    %240 = vector.extract_strided_slice %26 {offsets = [24, 0], sizes = [8, 256], strides = [1, 1]} : vector<32x256xf32> to vector<8x256xf32>
    %241 = vector.broadcast %197 : vector<1x256xf32> to vector<8x256xf32>
    %242 = arith.mulf %241, %240 : vector<8x256xf32>
    %243 = arith.addf %239, %242 : vector<8x256xf32>
    %244 = vector.extract_strided_slice %26 {offsets = [0, 0], sizes = [8, 256], strides = [1, 1]} : vector<32x256xf32> to vector<8x256xf32>
    %245 = vector.broadcast %129 : vector<1x256xf32> to vector<8x256xf32>
    %246 = arith.mulf %245, %244 : vector<8x256xf32>
    %247 = vector.extract_strided_slice %26 {offsets = [8, 0], sizes = [8, 256], strides = [1, 1]} : vector<32x256xf32> to vector<8x256xf32>
    %248 = vector.broadcast %152 : vector<1x256xf32> to vector<8x256xf32>
    %249 = arith.mulf %248, %247 : vector<8x256xf32>
    %250 = arith.addf %246, %249 : vector<8x256xf32>
    %251 = vector.extract_strided_slice %26 {offsets = [16, 0], sizes = [8, 256], strides = [1, 1]} : vector<32x256xf32> to vector<8x256xf32>
    %252 = vector.broadcast %175 : vector<1x256xf32> to vector<8x256xf32>
    %253 = arith.mulf %252, %251 : vector<8x256xf32>
    %254 = arith.addf %250, %253 : vector<8x256xf32>
    %255 = vector.extract_strided_slice %26 {offsets = [24, 0], sizes = [8, 256], strides = [1, 1]} : vector<32x256xf32> to vector<8x256xf32>
    %256 = vector.broadcast %198 : vector<1x256xf32> to vector<8x256xf32>
    %257 = arith.mulf %256, %255 : vector<8x256xf32>
    %258 = arith.addf %254, %257 : vector<8x256xf32>
    %259 = tpu.concatenate %213, %228, %243, %258 in 0 : vector<8x256xf32>, vector<8x256xf32>, vector<8x256xf32>, vector<8x256xf32> -> vector<32x256xf32>
    %260 = arith.addf %259, %0 : vector<32x256xf32>
    %c0_30 = arith.constant 0 : index
    %c0_31 = arith.constant 0 : index
    %261 = vector.load %arg4[%c0_30, %c0_31] : memref<32x256xf32, #tpu.memory_space<vmem>>, vector<32x256xf32>
    tpu.vector_store %arg4[%c0_30, %c0_31], %260 {strides = array<i32>} : memref<32x256xf32, #tpu.memory_space<vmem>>, vector<32x256xf32>,
    return
  }
  func.func @transform_0(%arg0: i32) -> (i32, i32) {
    %c0_i32 = arith.constant 0 : i32
    %c0_i32_0 = arith.constant 0 : i32
    return %c0_i32, %arg0 : i32, i32
  }
  func.func @transform_1(%arg0: i32) -> (i32, i32) {
    %c0_i32 = arith.constant 0 : i32
    %c0_i32_0 = arith.constant 0 : i32
    %c0_i32_1 = arith.constant 0 : i32
    return %c0_i32, %c0_i32_0 : i32, i32
  }
  func.func @transform_2(%arg0: i32) -> (i32, i32) {
    %c0_i32 = arith.constant 0 : i32
    %c0_i32_0 = arith.constant 0 : i32
    %c0_i32_1 = arith.constant 0 : i32
    return %c0_i32, %c0_i32_0 : i32, i32
  }
  func.func @transform_3(%arg0: i32) -> (i32, i32) {
    %c0_i32 = arith.constant 0 : i32
    %c0_i32_0 = arith.constant 0 : i32
    return %c0_i32, %arg0 : i32, i32
  }
}

</mosaic_0001>

<llo_original>
// kernel: _lambda_.1
$region0: #{_lambda_.1}
  #allocation0 [shape = 'u32[]', space=smem, size = 0x4, offset = 0x4, fixed_abs, tag = 'smem constant byte address 0x4 - core index']
  #allocation1 [shape = 'u32[72,128]{1,0:T(1,128)}', space=vmem, size = 0x9000, scoped, tag = 'internal scratch']
  %s0 = inlined_call_operand.vmem [shape: f32[32,512], index: 0, kind: input, shape index: {}]
  %s1 = inlined_call_operand.vmem [shape: f32[96,32], index: 1, kind: input, shape index: {}]
  %s2 = inlined_call_operand.vmem [shape: f32[96,1], index: 2, kind: input, shape index: {}]
  %s3 = inlined_call_operand.hbm [shape: f32[32,512], index: 3, kind: output, shape index: {}]
  %s4 = sld [smem:[#allocation0]]
  $region68: #{_lambda_.1} parent=0
    _
  %s6 = ssub.s32 1, %s4
  %s7 = scalar_select 0, %s6, %s4
  $region1: #{_lambda_.1} parent=0
    #allocation2 [shape = 'u8[65536]{0}', space=vmem, size = 0x10000, scoped, tag = 'input window, operand 0']
    #allocation3 [shape = 'u8[65536]{0}', space=vmem, size = 0x10000, scoped, tag = 'output window, operand 0']
    #allocation4 [shape = 's32[2]{0}', space=sflag, size = 0x8, scoped, tag = 'scoped memory for _lambda_.1']
    %8 = vsyncpa [#allocation4], 0
    %s9 = scalar_lea.sflag [#allocation4], 1
    %10 = vsyncpa %s9, 0
    loop: start=0, step=1, limit=4
    $region2: #{_lambda_.1} parent=1 // loop_pre_header
      _
    $region3: #{_lambda_.1} parent=1 // loop_header
      %s12 = sphi 0, %s16
      %p13 = scmp.ge.s32.totalorder %s12, 4
      %s22 = sphi 0, %s24
      %s25 = sphi 0, %s22
      %s26 = sphi 0, %s25
      %s42 = sphi 0, %s26
      %s46 = sphi 0, %s46
      %s48 = sphi 0, %s46
      %s49 = sphi 0, %s48
      %s63 = sphi 0, %s49
      %s67 = sphi 0, %s67
      %s69 = sphi 0, %s67
      %s70 = sphi 0, %s69
      %s84 = sphi 0, %s70
      %s90 = sphi 0, %s92
      %s93 = sphi 0, %s90
      %s94 = sphi 0, %s93
      %s110 = sphi 0, %s94
    $region4: #{_lambda_.1} parent=1 // loop_header_branch
      %15 = sbr.rel (%p13) target = $region8
    $region5: #{_lambda_.1} parent=1 // loop_body
      %s17 = ssub.s32 %s12, 1
      %s18 = ssub.s32 %s12, 2
      %s19 = sadd.s32 %s12, 1
      %s20 = ssub.s32 %s12, %s19
      %p21 = scmp.eq.s32.totalorder %s20, 0
      %s23 = sadd.s32 %s22, 1
      %s24 = scalar_select %p21, %s22, %s23
      %p27 = pneg %p21
      %p28 = scmp.eq.s32.totalorder %s12, 1
      %p29 = por %p27, %p28
      %p30 = scmp.ne.s32.totalorder %s22, %s25
      %p31 = scmp.eq.s32.totalorder %s12, 0
      %p32 = por %p30, %p31
      %p33 = scmp.ne.s32.totalorder %s22, %s25
      %p34 = scmp.eq.s32.totalorder %s17, 1
      %p35 = por %p33, %p34
      %p36 = scmp.ne.s32.totalorder %s25, %s26
      %p37 = scmp.eq.s32.totalorder %s17, 0
      %p38 = por %p36, %p37
      %p39 = scmp.ne.s32.totalorder %s25, %s26
      %p40 = scmp.eq.s32.totalorder %s18, 1
      %p41 = por %p39, %p40
      %p43 = scmp.ne.s32.totalorder %s26, %s42
      %p44 = scmp.eq.s32.totalorder %s18, 0
      %p45 = por %p43, %p44
      %s47 = sadd.s32 %s46, 1
      %p50 = scmp.eq.s32.totalorder %s12, 1
      %p51 = scmp.ne.s32.totalorder %s46, %s48
      %p52 = scmp.eq.s32.totalorder %s12, 0
      %p53 = por %p51, %p52
      %p54 = scmp.ne.s32.totalorder %s46, %s48
      %p55 = scmp.eq.s32.totalorder %s17, 1
      %p56 = por %p54, %p55
      %p57 = scmp.ne.s32.totalorder %s48, %s49
      %p58 = scmp.eq.s32.totalorder %s17, 0
      %p59 = por %p57, %p58
      %p60 = scmp.ne.s32.totalorder %s48, %s49
      %p61 = scmp.eq.s32.totalorder %s18, 1
      %p62 = por %p60, %p61
      %p64 = scmp.ne.s32.totalorder %s49, %s63
      %p65 = scmp.eq.s32.totalorder %s18, 0
      %p66 = por %p64, %p65
      %s68 = sadd.s32 %s67, 1
      %p71 = scmp.eq.s32.totalorder %s12, 1
      %p72 = scmp.ne.s32.totalorder %s67, %s69
      %p73 = scmp.eq.s32.totalorder %s12, 0
      %p74 = por %p72, %p73
      %p75 = scmp.ne.s32.totalorder %s67, %s69
      %p76 = scmp.eq.s32.totalorder %s17, 1
      %p77 = por %p75, %p76
      %p78 = scmp.ne.s32.totalorder %s69, %s70
      %p79 = scmp.eq.s32.totalorder %s17, 0
      %p80 = por %p78, %p79
      %p81 = scmp.ne.s32.totalorder %s69, %s70
      %p82 = scmp.eq.s32.totalorder %s18, 1
      %p83 = por %p81, %p82
      %p85 = scmp.ne.s32.totalorder %s70, %s84
      %p86 = scmp.eq.s32.totalorder %s18, 0
      %p87 = por %p85, %p86
      %s88 = ssub.s32 %s12, %s19
      %p89 = scmp.eq.s32.totalorder %s88, 0
      %s91 = sadd.s32 %s90, 1
      %s92 = scalar_select %p89, %s90, %s91
      %p95 = pneg %p89
      %p96 = scmp.eq.s32.totalorder %s12, 1
      %p97 = por %p95, %p96
      %p98 = scmp.ne.s32.totalorder %s90, %s93
      %p99 = scmp.eq.s32.totalorder %s12, 0
      %p100 = por %p98, %p99
      %p101 = scmp.ne.s32.totalorder %s90, %s93
      %p102 = scmp.eq.s32.totalorder %s17, 1
      %p103 = por %p101, %p102
      %p104 = scmp.ne.s32.totalorder %s93, %s94
      %p105 = scmp.eq.s32.totalorder %s17, 0
      %p106 = por %p104, %p105
      %p107 = scmp.ne.s32.totalorder %s93, %s94
      %p108 = scmp.eq.s32.totalorder %s18, 1
      %p109 = por %p107, %p108
      %p111 = scmp.ne.s32.totalorder %s94, %s110
      %p112 = scmp.eq.s32.totalorder %s18, 0
      %p113 = por %p111, %p112
      %p114 = scmp.le.s32.totalorder 1, %s12
      %p115 = scmp.lt.s32.totalorder %s12, 3
      %p116 = pnand %p114, %p115
      %p117 = pneg %p116
      // Predicated region
      $region9: #{_lambda_.1} parent=5 // pred_check
        _
      $region10: #{_lambda_.1} parent=5 // pred_check_branch
        %119 = sbr.rel (%p116) target = $region12
      $region11: #{_lambda_.1} parent=5 // pred_region
        %s120 = ssub.s32 %s12, 1
        // Predicated region
        $region13: #{_lambda_.1} parent=11 // pred_check
          %p121 = pneg %p59
        $region14: #{_lambda_.1} parent=11 // pred_check_branch
          %123 = sbr.rel (%p121) target = $region16
        $region15: #{_lambda_.1} parent=11 // pred_region
          _
        $region16: #{_lambda_.1} parent=11 // pred_fallthru
          _
        // Predicated region
        $region17: #{_lambda_.1} parent=11 // pred_check
          %p124 = pneg %p80
        $region18: #{_lambda_.1} parent=11 // pred_check_branch
          %126 = sbr.rel (%p124) target = $region20
        $region19: #{_lambda_.1} parent=11 // pred_region
          _
        $region20: #{_lambda_.1} parent=11 // pred_fallthru
          _
      $region12: #{_lambda_.1} parent=5 // pred_fallthru
        _
      %p127 = scmp.lt.s32.totalorder %s12, 2
      // Predicated region
      $region21: #{_lambda_.1} parent=5 // pred_check
        %p128 = pneg %p127
      $region22: #{_lambda_.1} parent=5 // pred_check_branch
        %130 = sbr.rel (%p128) target = $region24
      $region23: #{_lambda_.1} parent=5 // pred_region
        // Predicated region
        $region25: #{_lambda_.1} parent=23 // pred_check
          %p131 = pneg %p32
        $region26: #{_lambda_.1} parent=23 // pred_check_branch
          %133 = sbr.rel (%p131) target = $region28
        $region27: #{_lambda_.1} parent=23 // pred_region
          %s134 = sand.u32 %s22, 1
          %s135 = sand.u32 %s22, 1
          %s136 = smul.addr %s135, 64
          %s137 = scalar_lea.vmem [#allocation2], %s136
          %s138 = smul.u32 2, %s12
          %s139 = smul.addr %s138, 8
          %s140 = scalar_lea.vmem %s0, %s139
          // Predicated region
          $region29: #{_lambda_.1} parent=27 // pred_check
            _
          $region30: #{_lambda_.1} parent=27 // pred_check_branch
            %142 = sbr.rel (0) target = $region32
          $region31: #{_lambda_.1} parent=27 // pred_region
            // Predicated region
            $region33: #{_lambda_.1} parent=31 // pred_check
              _
            $region34: #{_lambda_.1} parent=31 // pred_check_branch
              %144 = sbr.rel (0) target = $region36
            $region35: #{_lambda_.1} parent=31 // pred_region
              loop: start=0, step=1, limit=1
              $region37: #{_lambda_.1} parent=35 // loop_pre_header
                _
              $region38: #{_lambda_.1} parent=35 // loop_header
                %s146 = sphi 0, %s150
                %p147 = scmp.ge.s32.totalorder %s146, 1
                %s151 = sphi %s140, %s140
                %s152 = sphi %s137, %s137
              $region39: #{_lambda_.1} parent=35 // loop_header_branch
                %149 = sbr.rel (%p147) target = $region43
              $region40: #{_lambda_.1} parent=35 // loop_body
                %v153 = vld [vmem:[%s151] sm:$0xff]
                %154 = vst [vmem:[%s152] sm:$0xff] %v153
                %v155 = vld [vmem:[%s151 + $0x8] sm:$0xff]
                %156 = vst [vmem:[%s152 + $0x8] sm:$0xff] %v155
                %v157 = vld [vmem:[%s151 + $0x20] sm:$0xff]
                %158 = vst [vmem:[%s152 + $0x10] sm:$0xff] %v157
                %v159 = vld [vmem:[%s151 + $0x28] sm:$0xff]
                %160 = vst [vmem:[%s152 + $0x18] sm:$0xff] %v159
                %v161 = vld [vmem:[%s151 + $0x40] sm:$0xff]
                %162 = vst [vmem:[%s152 + $0x20] sm:$0xff] %v161
                %v163 = vld [vmem:[%s151 + $0x48] sm:$0xff]
                %164 = vst [vmem:[%s152 + $0x28] sm:$0xff] %v163
                %v165 = vld [vmem:[%s151 + $0x60] sm:$0xff]
                %166 = vst [vmem:[%s152 + $0x30] sm:$0xff] %v165
                %v167 = vld [vmem:[%s151 + $0x68] sm:$0xff]
                %168 = vst [vmem:[%s152 + $0x38] sm:$0xff] %v167
              $region41: #{_lambda_.1} parent=35 // loop_footer
                %s150 = sadd.s32 1, %s146
              $region42: #{_lambda_.1} parent=35 // loop_footer_branch
                %145 = sbr.rel target = $region38
              $region43: #{_lambda_.1} parent=35 // loop_exit
                _
            $region36: #{_lambda_.1} parent=31 // pred_fallthru
              _
            // Predicated region
            $region44: #{_lambda_.1} parent=31 // pred_check
              _
            $region45: #{_lambda_.1} parent=31 // pred_check_branch
              %170 = sbr.rel target = $region47
            $region46: #{_lambda_.1} parent=31 // pred_region
              _
            $region47: #{_lambda_.1} parent=31 // pred_fallthru
              _
          $region32: #{_lambda_.1} parent=27 // pred_fallthru
            _
          %171 = vnop
        $region28: #{_lambda_.1} parent=23 // pred_fallthru
          _
      $region24: #{_lambda_.1} parent=5 // pred_fallthru
        _
      %p172 = scmp.le.s32.totalorder 1, %s12
      %p173 = scmp.lt.s32.totalorder %s12, 3
      %p174 = pnand %p172, %p173
      %p175 = pneg %p174
      // Predicated region
      $region48: #{_lambda_.1} parent=5 // pred_check
        _
      $region49: #{_lambda_.1} parent=5 // pred_check_branch
        %177 = sbr.rel (%p174) target = $region51
      $region50: #{_lambda_.1} parent=5 // pred_region
        %s178 = ssub.s32 %s12, 1
        %s179 = sand.u32 %s25, 1
        %s180 = sand.u32 %s25, 1
        %s181 = smul.addr %s180, 64
        %s182 = scalar_lea.vmem [#allocation2], %s181
        // Predicated region
        $region52: #{_lambda_.1} parent=50 // pred_check
          %p183 = pneg %p38
        $region53: #{_lambda_.1} parent=50 // pred_check_branch
          %185 = sbr.rel (%p183) target = $region55
        $region54: #{_lambda_.1} parent=50 // pred_region
          _
        $region55: #{_lambda_.1} parent=50 // pred_fallthru
          _
        %s186 = sand.u32 %s25, 1
        %s187 = sand.u32 %s25, 1
        %s188 = smul.addr %s187, 64
        %s189 = scalar_lea.vmem [#allocation2], %s188
        %p190 = pneg %p38
        %p191 = pneg %p35
        %p192 = pneg %p59
        %p193 = pneg %p56
        %p194 = pneg %p80
        %p195 = pneg %p77
        %p196 = pneg %p106
        %p197 = pneg %p103
        %s198 = sand.u32 %s93, 1
        %s199 = scalar_lea.sflag [#allocation4], %s198
        %s200 = sand.u32 %s93, 1
        %s201 = smul.addr %s200, 64
        %s202 = scalar_lea.vmem [#allocation3], %s201
        %s203 = smul.u32 2, %s17
        %s204 = smul.u32 2, %s17
        %v205 = vld [vmem:[%s182] sm:$0xff]
        %v206 = vld [vmem:[%s182 + $0x8] sm:$0xff]
        %v207 = vld [vmem:[%s182 + $0x10] sm:$0xff]
        %v208 = vld [vmem:[%s182 + $0x18] sm:$0xff]
        %v209 = vld [vmem:[%s182 + $0x20] sm:$0xff]
        %v210 = vld [vmem:[%s182 + $0x28] sm:$0xff]
        %v211 = vld [vmem:[%s182 + $0x30] sm:$0xff]
        %v212 = vld [vmem:[%s182 + $0x38] sm:$0xff]
        %v213 = vadd.f32 %v205, %v207
        %v214 = vadd.f32 %v213, %v209
        %v215 = vadd.f32 %v214, %v211
        %v216 = vrot.slane %v215, 4
        %v217 = vadd.f32 %v215, %v216
        %v218 = vrot.slane %v217, 2
        %v219 = vadd.f32 %v217, %v218
        %v220 = vrot.slane %v219, 1
        %v221 = vadd.f32 %v219, %v220
        %v222 = vadd.f32 %v206, %v208
        %v223 = vadd.f32 %v222, %v210
        %v224 = vadd.f32 %v223, %v212
        %v225 = vrot.slane %v224, 4
        %v226 = vadd.f32 %v224, %v225
        %v227 = vrot.slane %v226, 2
        %v228 = vadd.f32 %v226, %v227
        %v229 = vrot.slane %v228, 1
        %v230 = vadd.f32 %v228, %v229
        %v231 = vrcp.pop 32.0
        %v232 = vmul.f32 32.0, %v231
        %v233 = vsub.f32 1.0, %v232
        %v234 = vmul.f32 %v231, %v233
        %v235 = vadd.f32 %v231, %v234
        %vm236 = vweird.f32 %v231
        %v237 = vsel %vm236, %v231, %v235
        %v238 = vmul.f32 %v221, %v237
        %v239 = vmul.f32 %v230, %v237
        %v240 = vsub.f32 %v205, %v238
        %v241 = vsub.f32 %v206, %v239
        %v242 = vsub.f32 %v207, %v238
        %v243 = vsub.f32 %v208, %v239
        %v244 = vsub.f32 %v209, %v238
        %v245 = vsub.f32 %v210, %v239
        %v246 = vsub.f32 %v211, %v238
        %v247 = vsub.f32 %v212, %v239
        %v248 = vmul.f32 %v240, %v240
        %v249 = vmul.f32 %v241, %v241
        %v250 = vmul.f32 %v242, %v242
        %v251 = vmul.f32 %v243, %v243
        %v252 = vmul.f32 %v244, %v244
        %v253 = vmul.f32 %v245, %v245
        %v254 = vmul.f32 %v246, %v246
        %v255 = vmul.f32 %v247, %v247
        %v256 = vadd.f32 %v248, %v250
        %v257 = vadd.f32 %v256, %v252
        %v258 = vadd.f32 %v257, %v254
        %v259 = vrot.slane %v258, 4
        %v260 = vadd.f32 %v258, %v259
        %v261 = vrot.slane %v260, 2
        %v262 = vadd.f32 %v260, %v261
        %v263 = vrot.slane %v262, 1
        %v264 = vadd.f32 %v262, %v263
        %v265 = vadd.f32 %v249, %v251
        %v266 = vadd.f32 %v265, %v253
        %v267 = vadd.f32 %v266, %v255
        %v268 = vrot.slane %v267, 4
        %v269 = vadd.f32 %v267, %v268
        %v270 = vrot.slane %v269, 2
        %v271 = vadd.f32 %v269, %v270
        %v272 = vrot.slane %v271, 1
        %v273 = vadd.f32 %v271, %v272
        %v274 = vmul.f32 %v264, %v237
        %v275 = vmul.f32 %v273, %v237
        %v276 = vadd.f32 %v274, 1e-05
        %v277 = vadd.f32 %v275, 1e-05
        %v278 = vrsqrt.pop %v276
        %v279 = vmul.f32 %v278, %v276
        %v280 = vmul.f32 %v279, %v278
        %v281 = vmul.f32 0.5, %v280
        %v282 = vsub.f32 1.5, %v281
        %v283 = vmul.f32 %v278, %v282
        %vm284 = vweird.f32 %v276
        %vm285 = vweird.f32 %v278
        %vm286 = vmor %vm284, %vm285
        %v287 = vsel %vm286, %v278, %v283
        %v288 = vrsqrt.pop %v277
        %v289 = vmul.f32 %v288, %v277
        %v290 = vmul.f32 %v289, %v288
        %v291 = vmul.f32 0.5, %v290
        %v292 = vsub.f32 1.5, %v291
        %v293 = vmul.f32 %v288, %v292
        %vm294 = vweird.f32 %v277
        %vm295 = vweird.f32 %v288
        %vm296 = vmor %vm294, %vm295
        %v297 = vsel %vm296, %v288, %v293
        %v298 = vmul.f32 %v240, %v287
        %v299 = vmul.f32 %v241, %v297
        %v300 = vmul.f32 %v242, %v287
        %v301 = vmul.f32 %v243, %v297
        %v302 = vmul.f32 %v244, %v287
        %v303 = vmul.f32 %v245, %v297
        %v304 = vmul.f32 %v246, %v287
        %v305 = vmul.f32 %v247, %v297
        %v306 = vld [vmem:[%s1] sm:$0xff]
        %v307 = vld [vmem:[%s1 + $0x8] sm:$0xff]
        %v308 = vld [vmem:[%s1 + $0x10] sm:$0xff]
        %v309 = vld [vmem:[%s1 + $0x18] sm:$0xff]
        %v310 = vld [vmem:[%s1 + $0x20] sm:$0xff]
        %v311 = vld [vmem:[%s1 + $0x28] sm:$0xff]
        %v312 = vld [vmem:[%s1 + $0x30] sm:$0xff]
        %v313 = vld [vmem:[%s1 + $0x38] sm:$0xff]
        %v314 = vld [vmem:[%s1 + $0x40] sm:$0xff]
        %v315 = vld [vmem:[%s1 + $0x48] sm:$0xff]
        %v316 = vld [vmem:[%s1 + $0x50] sm:$0xff]
        %v317 = vld [vmem:[%s1 + $0x58] sm:$0xff]
        %v318 = vld [vmem:[%s2] sm:$0xff]
        %v319 = vld [vmem:[%s2 + $0x8] sm:$0xff]
        %v320 = vld [vmem:[%s2 + $0x10] sm:$0xff]
        %v321 = vld [vmem:[%s2 + $0x18] sm:$0xff]
        %v322 = vld [vmem:[%s2 + $0x20] sm:$0xff]
        %v323 = vld [vmem:[%s2 + $0x28] sm:$0xff]
        %v324 = vld [vmem:[%s2 + $0x30] sm:$0xff]
        %v325 = vld [vmem:[%s2 + $0x38] sm:$0xff]
        %v326 = vld [vmem:[%s2 + $0x40] sm:$0xff]
        %v327 = vld [vmem:[%s2 + $0x48] sm:$0xff]
        %v328 = vld [vmem:[%s2 + $0x50] sm:$0xff]
        %v329 = vld [vmem:[%s2 + $0x58] sm:$0xff]
        %331 = vset.pattern.permute.xlu0 0
        %332 = vperm.xlu0 %331, %v318
        %v333 = vpop.permute.xlu0 %332
        %336 = vset.pattern.permute.xlu0 0
        %337 = vperm.xlu0 %336, %v319
        %v338 = vpop.permute.xlu0 %337
        %341 = vset.pattern.permute.xlu0 0
        %342 = vperm.xlu0 %341, %v320
        %v343 = vpop.permute.xlu0 %342
        %346 = vset.pattern.permute.xlu0 0
        %347 = vperm.xlu0 %346, %v321
        %v348 = vpop.permute.xlu0 %347
        %351 = vset.pattern.permute.xlu0 0
        %352 = vperm.xlu0 %351, %v322
        %v353 = vpop.permute.xlu0 %352
        %356 = vset.pattern.permute.xlu0 0
        %357 = vperm.xlu0 %356, %v323
        %v358 = vpop.permute.xlu0 %357
        %361 = vset.pattern.permute.xlu0 0
        %362 = vperm.xlu0 %361, %v324
        %v363 = vpop.permute.xlu0 %362
        %366 = vset.pattern.permute.xlu0 0
        %367 = vperm.xlu0 %366, %v325
        %v368 = vpop.permute.xlu0 %367
        %371 = vset.pattern.permute.xlu0 0
        %372 = vperm.xlu0 %371, %v326
        %v373 = vpop.permute.xlu0 %372
        %376 = vset.pattern.permute.xlu0 0
        %377 = vperm.xlu0 %376, %v327
        %v378 = vpop.permute.xlu0 %377
        %381 = vset.pattern.permute.xlu0 0
        %382 = vperm.xlu0 %381, %v328
        %v383 = vpop.permute.xlu0 %382
        %386 = vset.pattern.permute.xlu0 0
        %387 = vperm.xlu0 %386, %v329
        %v388 = vpop.permute.xlu0 %387
        %vm390 = vcmask 261120
        %v392 = vsel %vm390, %v306, 0
        %v395 = vsel %vm390, %v307, 0
        %v398 = vsel %vm390, %v308, 0
        %v401 = vsel %vm390, %v309, 0
        %v404 = vsel %vm390, %v310, 0
        %v407 = vsel %vm390, %v311, 0
        %v410 = vsel %vm390, %v312, 0
        %v413 = vsel %vm390, %v313, 0
        %v416 = vsel %vm390, %v314, 0
        %v419 = vsel %vm390, %v315, 0
        %v422 = vsel %vm390, %v316, 0
        %v425 = vsel %vm390, %v317, 0
        %427 = vmatpush.msra.mxu0 0.0
        %428 = vmatpush.msra.mxu0 0.0
        %429 = vmatpush.msra.mxu0 0.0
        %430 = vmatpush.msra.mxu0 0.0
        %431 = vmatpush.msra.mxu0 0.0
        %432 = vmatpush.msra.mxu0 0.0
        %433 = vmatpush.msra.mxu0 0.0
        %434 = vmatpush.msra.mxu0 0.0
        %435 = vmatpush.msra.mxu0 0.0
        %436 = vmatpush.msra.mxu0 0.0
        %437 = vmatpush.msra.mxu0 0.0
        %438 = vmatpush.msra.mxu0 0.0
        %439 = vmatpush.msra.mxu0 %v304
        %440 = vmatpush.msra.mxu0 %v302
        %441 = vmatpush.msra.mxu0 %v300
        %442 = vmatpush.msra.mxu0 %v298
        %443 = vmatmul.f32.gmra.mxu0 %v392
        %v444 = vpop.f32.mrf.mxu0
        %v445 = vadd.f32 %v333, %v444
        %446 = vmatmul.f32.gmra.mxu0 %v395
        %v447 = vpop.f32.mrf.mxu0
        %v448 = vadd.f32 %v338, %v447
        %449 = vmatmul.f32.gmra.mxu0 %v398
        %v450 = vpop.f32.mrf.mxu0
        %v451 = vadd.f32 %v343, %v450
        %452 = vmatmul.f32.gmra.mxu0 %v401
        %v453 = vpop.f32.mrf.mxu0
        %v454 = vadd.f32 %v348, %v453
        %455 = vmatmul.f32.gmra.mxu0 %v404
        %v456 = vpop.f32.mrf.mxu0
        %v457 = vadd.f32 %v353, %v456
        %458 = vmatmul.f32.gmra.mxu0 %v407
        %v459 = vpop.f32.mrf.mxu0
        %v460 = vadd.f32 %v358, %v459
        %461 = vmatmul.f32.gmra.mxu0 %v410
        %v462 = vpop.f32.mrf.mxu0
        %v463 = vadd.f32 %v363, %v462
        %464 = vmatmul.f32.gmra.mxu0 %v413
        %v465 = vpop.f32.mrf.mxu0
        %v466 = vadd.f32 %v368, %v465
        %467 = vmatmul.f32.gmra.mxu0 %v416
        %v468 = vpop.f32.mrf.mxu0
        %v469 = vadd.f32 %v373, %v468
        %470 = vmatmul.f32.gmra.mxu0 %v419
        %v471 = vpop.f32.mrf.mxu0
        %v472 = vadd.f32 %v378, %v471
        %473 = vmatmul.f32.gmra.mxu0 %v422
        %v474 = vpop.f32.mrf.mxu0
        %v475 = vadd.f32 %v383, %v474
        %476 = vmatmul.f32.gmra.mxu0 %v425
        %v477 = vpop.f32.mrf.mxu0
        %v478 = vadd.f32 %v388, %v477
        %479 = vdwg.mxu0
        %480 = vmatpush.msra.mxu0 0.0
        %481 = vmatpush.msra.mxu0 0.0
        %482 = vmatpush.msra.mxu0 0.0
        %483 = vmatpush.msra.mxu0 0.0
        %484 = vmatpush.msra.mxu0 0.0
        %485 = vmatpush.msra.mxu0 0.0
        %486 = vmatpush.msra.mxu0 0.0
        %487 = vmatpush.msra.mxu0 0.0
        %488 = vmatpush.msra.mxu0 0.0
        %489 = vmatpush.msra.mxu0 0.0
        %490 = vmatpush.msra.mxu0 0.0
        %491 = vmatpush.msra.mxu0 0.0
        %492 = vmatpush.msra.mxu0 %v305
        %493 = vmatpush.msra.mxu0 %v303
        %494 = vmatpush.msra.mxu0 %v301
        %495 = vmatpush.msra.mxu0 %v299
        %496 = vmatmul.f32.gmra.mxu0 %v392
        %v497 = vpop.f32.mrf.mxu0
        %v498 = vadd.f32 %v333, %v497
        %499 = vmatmul.f32.gmra.mxu0 %v395
        %v500 = vpop.f32.mrf.mxu0
        %v501 = vadd.f32 %v338, %v500
        %502 = vmatmul.f32.gmra.mxu0 %v398
        %v503 = vpop.f32.mrf.mxu0
        %v504 = vadd.f32 %v343, %v503
        %505 = vmatmul.f32.gmra.mxu0 %v401
        %v506 = vpop.f32.mrf.mxu0
        %v507 = vadd.f32 %v348, %v506
        %508 = vmatmul.f32.gmra.mxu0 %v404
        %v509 = vpop.f32.mrf.mxu0
        %v510 = vadd.f32 %v353, %v509
        %511 = vmatmul.f32.gmra.mxu0 %v407
        %v512 = vpop.f32.mrf.mxu0
        %v513 = vadd.f32 %v358, %v512
        %514 = vmatmul.f32.gmra.mxu0 %v410
        %v515 = vpop.f32.mrf.mxu0
        %v516 = vadd.f32 %v363, %v515
        %517 = vmatmul.f32.gmra.mxu0 %v413
        %v518 = vpop.f32.mrf.mxu0
        %v519 = vadd.f32 %v368, %v518
        %520 = vmatmul.f32.gmra.mxu0 %v416
        %v521 = vpop.f32.mrf.mxu0
        %v522 = vadd.f32 %v373, %v521
        %523 = vmatmul.f32.gmra.mxu0 %v419
        %v524 = vpop.f32.mrf.mxu0
        %v525 = vadd.f32 %v378, %v524
        %526 = vmatmul.f32.gmra.mxu0 %v422
        %v527 = vpop.f32.mrf.mxu0
        %v528 = vadd.f32 %v383, %v527
        %529 = vmatmul.f32.gmra.mxu0 %v425
        %v530 = vpop.f32.mrf.mxu0
        %v531 = vadd.f32 %v388, %v530
        %532 = vdwg.mxu0
        %v533 = vmul.f32 %v445, %v457
        %v534 = vmul.f32 %v498, %v510
        %v535 = vrot.slane %v533, 4
        %v536 = vadd.f32 %v533, %v535
        %v537 = vrot.slane %v536, 2
        %v538 = vadd.f32 %v536, %v537
        %v539 = vrot.slane %v538, 1
        %v540 = vadd.f32 %v538, %v539
        %v541 = vrot.slane %v534, 4
        %v542 = vadd.f32 %v534, %v541
        %v543 = vrot.slane %v542, 2
        %v544 = vadd.f32 %v542, %v543
        %v545 = vrot.slane %v544, 1
        %v546 = vadd.f32 %v544, %v545
        %v547 = vmul.f32 %v445, %v460
        %v548 = vmul.f32 %v498, %v513
        %v549 = vrot.slane %v547, 4
        %v550 = vadd.f32 %v547, %v549
        %v551 = vrot.slane %v550, 2
        %v552 = vadd.f32 %v550, %v551
        %v553 = vrot.slane %v552, 1
        %v554 = vadd.f32 %v552, %v553
        %v555 = vrot.slane %v548, 4
        %v556 = vadd.f32 %v548, %v555
        %v557 = vrot.slane %v556, 2
        %v558 = vadd.f32 %v556, %v557
        %v559 = vrot.slane %v558, 1
        %v560 = vadd.f32 %v558, %v559
        %v561 = vmul.f32 %v445, %v463
        %v562 = vmul.f32 %v498, %v516
        %v563 = vrot.slane %v561, 4
        %v564 = vadd.f32 %v561, %v563
        %v565 = vrot.slane %v564, 2
        %v566 = vadd.f32 %v564, %v565
        %v567 = vrot.slane %v566, 1
        %v568 = vadd.f32 %v566, %v567
        %v569 = vrot.slane %v562, 4
        %v570 = vadd.f32 %v562, %v569
        %v571 = vrot.slane %v570, 2
        %v572 = vadd.f32 %v570, %v571
        %v573 = vrot.slane %v572, 1
        %v574 = vadd.f32 %v572, %v573
        %v575 = vmul.f32 %v445, %v466
        %v576 = vmul.f32 %v498, %v519
        %v577 = vrot.slane %v575, 4
        %v578 = vadd.f32 %v575, %v577
        %v579 = vrot.slane %v578, 2
        %v580 = vadd.f32 %v578, %v579
        %v581 = vrot.slane %v580, 1
        %v582 = vadd.f32 %v580, %v581
        %v583 = vrot.slane %v576, 4
        %v584 = vadd.f32 %v576, %v583
        %v585 = vrot.slane %v584, 2
        %v586 = vadd.f32 %v584, %v585
        %v587 = vrot.slane %v586, 1
        %v588 = vadd.f32 %v586, %v587
        %v589 = vmul.f32 %v448, %v457
        %v590 = vmul.f32 %v501, %v510
        %v591 = vrot.slane %v589, 4
        %v592 = vadd.f32 %v589, %v591
        %v593 = vrot.slane %v592, 2
        %v594 = vadd.f32 %v592, %v593
        %v595 = vrot.slane %v594, 1
        %v596 = vadd.f32 %v594, %v595
        %v597 = vrot.slane %v590, 4
        %v598 = vadd.f32 %v590, %v597
        %v599 = vrot.slane %v598, 2
        %v600 = vadd.f32 %v598, %v599
        %v601 = vrot.slane %v600, 1
        %v602 = vadd.f32 %v600, %v601
        %v603 = vmul.f32 %v448, %v460
        %v604 = vmul.f32 %v501, %v513
        %v605 = vrot.slane %v603, 4
        %v606 = vadd.f32 %v603, %v605
        %v607 = vrot.slane %v606, 2
        %v608 = vadd.f32 %v606, %v607
        %v609 = vrot.slane %v608, 1
        %v610 = vadd.f32 %v608, %v609
        %v611 = vrot.slane %v604, 4
        %v612 = vadd.f32 %v604, %v611
        %v613 = vrot.slane %v612, 2
        %v614 = vadd.f32 %v612, %v613
        %v615 = vrot.slane %v614, 1
        %v616 = vadd.f32 %v614, %v615
        %v617 = vmul.f32 %v448, %v463
        %v618 = vmul.f32 %v501, %v516
        %v619 = vrot.slane %v617, 4
        %v620 = vadd.f32 %v617, %v619
        %v621 = vrot.slane %v620, 2
        %v622 = vadd.f32 %v620, %v621
        %v623 = vrot.slane %v622, 1
        %v624 = vadd.f32 %v622, %v623
        %v625 = vrot.slane %v618, 4
        %v626 = vadd.f32 %v618, %v625
        %v627 = vrot.slane %v626, 2
        %v628 = vadd.f32 %v626, %v627
        %v629 = vrot.slane %v628, 1
        %v630 = vadd.f32 %v628, %v629
        %v631 = vmul.f32 %v448, %v466
        %v632 = vmul.f32 %v501, %v519
        %v633 = vrot.slane %v631, 4
        %v634 = vadd.f32 %v631, %v633
        %v635 = vrot.slane %v634, 2
        %v636 = vadd.f32 %v634, %v635
        %v637 = vrot.slane %v636, 1
        %v638 = vadd.f32 %v636, %v637
        %v639 = vrot.slane %v632, 4
        %v640 = vadd.f32 %v632, %v639
        %v641 = vrot.slane %v640, 2
        %v642 = vadd.f32 %v640, %v641
        %v643 = vrot.slane %v642, 1
        %v644 = vadd.f32 %v642, %v643
        %v645 = vmul.f32 %v451, %v457
        %v646 = vmul.f32 %v504, %v510
        %v647 = vrot.slane %v645, 4
        %v648 = vadd.f32 %v645, %v647
        %v649 = vrot.slane %v648, 2
        %v650 = vadd.f32 %v648, %v649
        %v651 = vrot.slane %v650, 1
        %v652 = vadd.f32 %v650, %v651
        %v653 = vrot.slane %v646, 4
        %v654 = vadd.f32 %v646, %v653
        %v655 = vrot.slane %v654, 2
        %v656 = vadd.f32 %v654, %v655
        %v657 = vrot.slane %v656, 1
        %v658 = vadd.f32 %v656, %v657
        %v659 = vmul.f32 %v451, %v460
        %v660 = vmul.f32 %v504, %v513
        %v661 = vrot.slane %v659, 4
        %v662 = vadd.f32 %v659, %v661
        %v663 = vrot.slane %v662, 2
        %v664 = vadd.f32 %v662, %v663
        %v665 = vrot.slane %v664, 1
        %v666 = vadd.f32 %v664, %v665
        %v667 = vrot.slane %v660, 4
        %v668 = vadd.f32 %v660, %v667
        %v669 = vrot.slane %v668, 2
        %v670 = vadd.f32 %v668, %v669
        %v671 = vrot.slane %v670, 1
        %v672 = vadd.f32 %v670, %v671
        %v673 = vmul.f32 %v451, %v463
        %v674 = vmul.f32 %v504, %v516
        %v675 = vrot.slane %v673, 4
        %v676 = vadd.f32 %v673, %v675
        %v677 = vrot.slane %v676, 2
        %v678 = vadd.f32 %v676, %v677
        %v679 = vrot.slane %v678, 1
        %v680 = vadd.f32 %v678, %v679
        %v681 = vrot.slane %v674, 4
        %v682 = vadd.f32 %v674, %v681
        %v683 = vrot.slane %v682, 2
        %v684 = vadd.f32 %v682, %v683
        %v685 = vrot.slane %v684, 1
        %v686 = vadd.f32 %v684, %v685
        %v687 = vmul.f32 %v451, %v466
        %v688 = vmul.f32 %v504, %v519
        %v689 = vrot.slane %v687, 4
        %v690 = vadd.f32 %v687, %v689
        %v691 = vrot.slane %v690, 2
        %v692 = vadd.f32 %v690, %v691
        %v693 = vrot.slane %v692, 1
        %v694 = vadd.f32 %v692, %v693
        %v695 = vrot.slane %v688, 4
        %v696 = vadd.f32 %v688, %v695
        %v697 = vrot.slane %v696, 2
        %v698 = vadd.f32 %v696, %v697
        %v699 = vrot.slane %v698, 1
        %v700 = vadd.f32 %v698, %v699
        %v701 = vmul.f32 %v454, %v457
        %v702 = vmul.f32 %v507, %v510
        %v703 = vrot.slane %v701, 4
        %v704 = vadd.f32 %v701, %v703
        %v705 = vrot.slane %v704, 2
        %v706 = vadd.f32 %v704, %v705
        %v707 = vrot.slane %v706, 1
        %v708 = vadd.f32 %v706, %v707
        %v709 = vrot.slane %v702, 4
        %v710 = vadd.f32 %v702, %v709
        %v711 = vrot.slane %v710, 2
        %v712 = vadd.f32 %v710, %v711
        %v713 = vrot.slane %v712, 1
        %v714 = vadd.f32 %v712, %v713
        %v715 = vmul.f32 %v454, %v460
        %v716 = vmul.f32 %v507, %v513
        %v717 = vrot.slane %v715, 4
        %v718 = vadd.f32 %v715, %v717
        %v719 = vrot.slane %v718, 2
        %v720 = vadd.f32 %v718, %v719
        %v721 = vrot.slane %v720, 1
        %v722 = vadd.f32 %v720, %v721
        %v723 = vrot.slane %v716, 4
        %v724 = vadd.f32 %v716, %v723
        %v725 = vrot.slane %v724, 2
        %v726 = vadd.f32 %v724, %v725
        %v727 = vrot.slane %v726, 1
        %v728 = vadd.f32 %v726, %v727
        %v729 = vmul.f32 %v454, %v463
        %v730 = vmul.f32 %v507, %v516
        %v731 = vrot.slane %v729, 4
        %v732 = vadd.f32 %v729, %v731
        %v733 = vrot.slane %v732, 2
        %v734 = vadd.f32 %v732, %v733
        %v735 = vrot.slane %v734, 1
        %v736 = vadd.f32 %v734, %v735
        %v737 = vrot.slane %v730, 4
        %v738 = vadd.f32 %v730, %v737
        %v739 = vrot.slane %v738, 2
        %v740 = vadd.f32 %v738, %v739
        %v741 = vrot.slane %v740, 1
        %v742 = vadd.f32 %v740, %v741
        %v743 = vmul.f32 %v454, %v466
        %v744 = vmul.f32 %v507, %v519
        %v745 = vrot.slane %v743, 4
        %v746 = vadd.f32 %v743, %v745
        %v747 = vrot.slane %v746, 2
        %v748 = vadd.f32 %v746, %v747
        %v749 = vrot.slane %v748, 1
        %v750 = vadd.f32 %v748, %v749
        %v751 = vrot.slane %v744, 4
        %v752 = vadd.f32 %v744, %v751
        %v753 = vrot.slane %v752, 2
        %v754 = vadd.f32 %v752, %v753
        %v755 = vrot.slane %v754, 1
        %v756 = vadd.f32 %v754, %v755
        %v757 = vmax.f32 %v540, %v596
        %v758 = vmax.f32 %v546, %v602
        %v759 = vmax.f32 %v757, %v652
        %v760 = vmax.f32 %v758, %v658
        %v761 = vmax.f32 %v759, %v708
        %v762 = vmax.f32 %v760, %v714
        %v763 = vsub.f32 %v540, %v761
        %v764 = vsub.f32 %v546, %v762
        %v765 = vmul.f32 %v763, 1.442695
        %v766 = vpow.pop %v765
        %v767 = vmul.f32 %v764, 1.442695
        %v768 = vpow.pop %v767
        %v769 = vsub.f32 %v596, %v761
        %v770 = vsub.f32 %v602, %v762
        %v771 = vmul.f32 %v769, 1.442695
        %v772 = vpow.pop %v771
        %v773 = vmul.f32 %v770, 1.442695
        %v774 = vpow.pop %v773
        %v775 = vsub.f32 %v652, %v761
        %v776 = vsub.f32 %v658, %v762
        %v777 = vmul.f32 %v775, 1.442695
        %v778 = vpow.pop %v777
        %v779 = vmul.f32 %v776, 1.442695
        %v780 = vpow.pop %v779
        %v781 = vsub.f32 %v708, %v761
        %v782 = vsub.f32 %v714, %v762
        %v783 = vmul.f32 %v781, 1.442695
        %v784 = vpow.pop %v783
        %v785 = vmul.f32 %v782, 1.442695
        %v786 = vpow.pop %v785
        %v787 = vadd.f32 %v766, %v772
        %v788 = vadd.f32 %v768, %v774
        %v789 = vadd.f32 %v787, %v778
        %v790 = vadd.f32 %v788, %v780
        %v791 = vadd.f32 %v789, %v784
        %v792 = vadd.f32 %v790, %v786
        %v793 = vrcp.pop %v791
        %v794 = vrcp.pop %v792
        %v795 = vmul.f32 %v791, %v793
        %v796 = vmul.f32 %v792, %v794
        %v797 = vsub.f32 2.0, %v795
        %v798 = vsub.f32 2.0, %v796
        %v799 = vmul.f32 %v793, %v797
        %v800 = vmul.f32 %v794, %v798
        %v801 = vmul.f32 %v766, %v799
        %v802 = vmul.f32 %v768, %v800
        %v803 = vmul.f32 %v772, %v799
        %v804 = vmul.f32 %v774, %v800
        %v805 = vmul.f32 %v778, %v799
        %v806 = vmul.f32 %v780, %v800
        %v807 = vmul.f32 %v784, %v799
        %v808 = vmul.f32 %v786, %v800
        %v809 = vmax.f32 %v554, %v610
        %v810 = vmax.f32 %v560, %v616
        %v811 = vmax.f32 %v809, %v666
        %v812 = vmax.f32 %v810, %v672
        %v813 = vmax.f32 %v811, %v722
        %v814 = vmax.f32 %v812, %v728
        %v815 = vsub.f32 %v554, %v813
        %v816 = vsub.f32 %v560, %v814
        %v817 = vmul.f32 %v815, 1.442695
        %v818 = vpow.pop %v817
        %v819 = vmul.f32 %v816, 1.442695
        %v820 = vpow.pop %v819
        %v821 = vsub.f32 %v610, %v813
        %v822 = vsub.f32 %v616, %v814
        %v823 = vmul.f32 %v821, 1.442695
        %v824 = vpow.pop %v823
        %v825 = vmul.f32 %v822, 1.442695
        %v826 = vpow.pop %v825
        %v827 = vsub.f32 %v666, %v813
        %v828 = vsub.f32 %v672, %v814
        %v829 = vmul.f32 %v827, 1.442695
        %v830 = vpow.pop %v829
        %v831 = vmul.f32 %v828, 1.442695
        %v832 = vpow.pop %v831
        %v833 = vsub.f32 %v722, %v813
        %v834 = vsub.f32 %v728, %v814
        %v835 = vmul.f32 %v833, 1.442695
        %v836 = vpow.pop %v835
        %v837 = vmul.f32 %v834, 1.442695
        %v838 = vpow.pop %v837
        %v839 = vadd.f32 %v818, %v824
        %v840 = vadd.f32 %v820, %v826
        %v841 = vadd.f32 %v839, %v830
        %v842 = vadd.f32 %v840, %v832
        %v843 = vadd.f32 %v841, %v836
        %v844 = vadd.f32 %v842, %v838
        %v845 = vrcp.pop %v843
        %v846 = vrcp.pop %v844
        %v847 = vmul.f32 %v843, %v845
        %v848 = vmul.f32 %v844, %v846
        %v849 = vsub.f32 2.0, %v847
        %v850 = vsub.f32 2.0, %v848
        %v851 = vmul.f32 %v845, %v849
        %v852 = vmul.f32 %v846, %v850
        %v853 = vmul.f32 %v818, %v851
        %v854 = vmul.f32 %v820, %v852
        %v855 = vmul.f32 %v824, %v851
        %v856 = vmul.f32 %v826, %v852
        %v857 = vmul.f32 %v830, %v851
        %v858 = vmul.f32 %v832, %v852
        %v859 = vmul.f32 %v836, %v851
        %v860 = vmul.f32 %v838, %v852
        %v861 = vmax.f32 %v568, %v624
        %v862 = vmax.f32 %v574, %v630
        %v863 = vmax.f32 %v861, %v680
        %v864 = vmax.f32 %v862, %v686
        %v865 = vmax.f32 %v863, %v736
        %v866 = vmax.f32 %v864, %v742
        %v867 = vsub.f32 %v568, %v865
        %v868 = vsub.f32 %v574, %v866
        %v869 = vmul.f32 %v867, 1.442695
        %v870 = vpow.pop %v869
        %v871 = vmul.f32 %v868, 1.442695
        %v872 = vpow.pop %v871
        %v873 = vsub.f32 %v624, %v865
        %v874 = vsub.f32 %v630, %v866
        %v875 = vmul.f32 %v873, 1.442695
        %v876 = vpow.pop %v875
        %v877 = vmul.f32 %v874, 1.442695
        %v878 = vpow.pop %v877
        %v879 = vsub.f32 %v680, %v865
        %v880 = vsub.f32 %v686, %v866
        %v881 = vmul.f32 %v879, 1.442695
        %v882 = vpow.pop %v881
        %v883 = vmul.f32 %v880, 1.442695
        %v884 = vpow.pop %v883
        %v885 = vsub.f32 %v736, %v865
        %v886 = vsub.f32 %v742, %v866
        %v887 = vmul.f32 %v885, 1.442695
        %v888 = vpow.pop %v887
        %v889 = vmul.f32 %v886, 1.442695
        %v890 = vpow.pop %v889
        %v891 = vadd.f32 %v870, %v876
        %v892 = vadd.f32 %v872, %v878
        %v893 = vadd.f32 %v891, %v882
        %v894 = vadd.f32 %v892, %v884
        %v895 = vadd.f32 %v893, %v888
        %v896 = vadd.f32 %v894, %v890
        %v897 = vrcp.pop %v895
        %v898 = vrcp.pop %v896
        %v899 = vmul.f32 %v895, %v897
        %v900 = vmul.f32 %v896, %v898
        %v901 = vsub.f32 2.0, %v899
        %v902 = vsub.f32 2.0, %v900
        %v903 = vmul.f32 %v897, %v901
        %v904 = vmul.f32 %v898, %v902
        %v905 = vmul.f32 %v870, %v903
        %v906 = vmul.f32 %v872, %v904
        %v907 = vmul.f32 %v876, %v903
        %v908 = vmul.f32 %v878, %v904
        %v909 = vmul.f32 %v882, %v903
        %v910 = vmul.f32 %v884, %v904
        %v911 = vmul.f32 %v888, %v903
        %v912 = vmul.f32 %v890, %v904
        %v913 = vmax.f32 %v582, %v638
        %v914 = vmax.f32 %v588, %v644
        %v915 = vmax.f32 %v913, %v694
        %v916 = vmax.f32 %v914, %v700
        %v917 = vmax.f32 %v915, %v750
        %v918 = vmax.f32 %v916, %v756
        %v919 = vsub.f32 %v582, %v917
        %v920 = vsub.f32 %v588, %v918
        %v921 = vmul.f32 %v919, 1.442695
        %v922 = vpow.pop %v921
        %v923 = vmul.f32 %v920, 1.442695
        %v924 = vpow.pop %v923
        %v925 = vsub.f32 %v638, %v917
        %v926 = vsub.f32 %v644, %v918
        %v927 = vmul.f32 %v925, 1.442695
        %v928 = vpow.pop %v927
        %v929 = vmul.f32 %v926, 1.442695
        %v930 = vpow.pop %v929
        %v931 = vsub.f32 %v694, %v917
        %v932 = vsub.f32 %v700, %v918
        %v933 = vmul.f32 %v931, 1.442695
        %v934 = vpow.pop %v933
        %v935 = vmul.f32 %v932, 1.442695
        %v936 = vpow.pop %v935
        %v937 = vsub.f32 %v750, %v917
        %v938 = vsub.f32 %v756, %v918
        %v939 = vmul.f32 %v937, 1.442695
        %v940 = vpow.pop %v939
        %v941 = vmul.f32 %v938, 1.442695
        %v942 = vpow.pop %v941
        %v943 = vadd.f32 %v922, %v928
        %v944 = vadd.f32 %v924, %v930
        %v945 = vadd.f32 %v943, %v934
        %v946 = vadd.f32 %v944, %v936
        %v947 = vadd.f32 %v945, %v940
        %v948 = vadd.f32 %v946, %v942
        %v949 = vrcp.pop %v947
        %v950 = vrcp.pop %v948
        %v951 = vmul.f32 %v947, %v949
        %v952 = vmul.f32 %v948, %v950
        %v953 = vsub.f32 2.0, %v951
        %v954 = vsub.f32 2.0, %v952
        %v955 = vmul.f32 %v949, %v953
        %v956 = vmul.f32 %v950, %v954
        %v957 = vmul.f32 %v922, %v955
        %v958 = vmul.f32 %v924, %v956
        %v959 = vmul.f32 %v928, %v955
        %v960 = vmul.f32 %v930, %v956
        %v961 = vmul.f32 %v934, %v955
        %v962 = vmul.f32 %v936, %v956
        %v963 = vmul.f32 %v940, %v955
        %v964 = vmul.f32 %v942, %v956
        %v965 = vmul.f32 %v801, %v469
        %v966 = vmul.f32 %v802, %v522
        %v967 = vmul.f32 %v853, %v472
        %v968 = vmul.f32 %v854, %v525
        %v969 = vadd.f32 %v965, %v967
        %v970 = vadd.f32 %v966, %v968
        %v971 = vmul.f32 %v905, %v475
        %v972 = vmul.f32 %v906, %v528
        %v973 = vadd.f32 %v969, %v971
        %v974 = vadd.f32 %v970, %v972
        %v975 = vmul.f32 %v957, %v478
        %v976 = vmul.f32 %v958, %v531
        %v977 = vadd.f32 %v973, %v975
        %v978 = vadd.f32 %v974, %v976
        %v979 = vmul.f32 %v803, %v469
        %v980 = vmul.f32 %v804, %v522
        %v981 = vmul.f32 %v855, %v472
        %v982 = vmul.f32 %v856, %v525
        %v983 = vadd.f32 %v979, %v981
        %v984 = vadd.f32 %v980, %v982
        %v985 = vmul.f32 %v907, %v475
        %v986 = vmul.f32 %v908, %v528
        %v987 = vadd.f32 %v983, %v985
        %v988 = vadd.f32 %v984, %v986
        %v989 = vmul.f32 %v959, %v478
        %v990 = vmul.f32 %v960, %v531
        %v991 = vadd.f32 %v987, %v989
        %v992 = vadd.f32 %v988, %v990
        %v993 = vmul.f32 %v805, %v469
        %v994 = vmul.f32 %v806, %v522
        %v995 = vmul.f32 %v857, %v472
        %v996 = vmul.f32 %v858, %v525
        %v997 = vadd.f32 %v993, %v995
        %v998 = vadd.f32 %v994, %v996
        %v999 = vmul.f32 %v909, %v475
        %v1000 = vmul.f32 %v910, %v528
        %v1001 = vadd.f32 %v997, %v999
        %v1002 = vadd.f32 %v998, %v1000
        %v1003 = vmul.f32 %v961, %v478
        %v1004 = vmul.f32 %v962, %v531
        %v1005 = vadd.f32 %v1001, %v1003
        %v1006 = vadd.f32 %v1002, %v1004
        %v1007 = vmul.f32 %v807, %v469
        %v1008 = vmul.f32 %v808, %v522
        %v1009 = vmul.f32 %v859, %v472
        %v1010 = vmul.f32 %v860, %v525
        %v1011 = vadd.f32 %v1007, %v1009
        %v1012 = vadd.f32 %v1008, %v1010
        %v1013 = vmul.f32 %v911, %v475
        %v1014 = vmul.f32 %v912, %v528
        %v1015 = vadd.f32 %v1011, %v1013
        %v1016 = vadd.f32 %v1012, %v1014
        %v1017 = vmul.f32 %v963, %v478
        %v1018 = vmul.f32 %v964, %v531
        %v1019 = vadd.f32 %v1015, %v1017
        %v1020 = vadd.f32 %v1016, %v1018
        %v1021 = vadd.f32 %v977, %v205
        %v1022 = vadd.f32 %v978, %v206
        %v1023 = vadd.f32 %v991, %v207
        %v1024 = vadd.f32 %v992, %v208
        %v1025 = vadd.f32 %v1005, %v209
        %v1026 = vadd.f32 %v1006, %v210
        %v1027 = vadd.f32 %v1019, %v211
        %v1028 = vadd.f32 %v1020, %v212
        %1029 = vst [vmem:[%s202] sm:$0xff] %v1021
        %1030 = vst [vmem:[%s202 + $0x8] sm:$0xff] %v1022
        %1031 = vst [vmem:[%s202 + $0x10] sm:$0xff] %v1023
        %1032 = vst [vmem:[%s202 + $0x18] sm:$0xff] %v1024
        %1033 = vst [vmem:[%s202 + $0x20] sm:$0xff] %v1025
        %1034 = vst [vmem:[%s202 + $0x28] sm:$0xff] %v1026
        %1035 = vst [vmem:[%s202 + $0x30] sm:$0xff] %v1027
        %1036 = vst [vmem:[%s202 + $0x38] sm:$0xff] %v1028
        %s1037 = sand.u32 %s93, 1
        %s1038 = scalar_lea.sflag [#allocation4], %s1037
        %s1039 = sand.u32 %s93, 1
        %s1040 = smul.addr %s1039, 64
        %s1041 = scalar_lea.vmem [#allocation3], %s1040
        // Predicated region
        $region56: #{_lambda_.1} parent=50 // pred_check
          %p1042 = pneg %p103
        $region57: #{_lambda_.1} parent=50 // pred_check_branch
          %1044 = sbr.rel (%p1042) target = $region59
        $region58: #{_lambda_.1} parent=50 // pred_region
          %s1045 = smul.u32 2, %s17
          %1047 = vsyncadd %s1038, 0
          %s1048 = smul.addr %s1045, 8
          %s1049 = scalar_lea.hbm %s3, %s1048
          %s1050 = sshll.u32 %s1041, 4
          %s1051 = int_to_ptr.vmem [resolvable:$true] %s1050
          %s1052 = sshll.u32 %s1049, 4
          %s1053 = int_to_ptr.hbm [resolvable:$true] %s1052
          %1058 = dma.vmem_to_hbm [thread:$0]  %s1051, 1024, %s1053, %s1038, 256, 512, 16
        $region59: #{_lambda_.1} parent=50 // pred_fallthru
          _
      $region51: #{_lambda_.1} parent=5 // pred_fallthru
        _
      %p1059 = scmp.le.s32.totalorder 2, %s12
      // Predicated region
      $region60: #{_lambda_.1} parent=5 // pred_check
        %p1060 = pneg %p1059
      $region61: #{_lambda_.1} parent=5 // pred_check_branch
        %1062 = sbr.rel (%p1060) target = $region63
      $region62: #{_lambda_.1} parent=5 // pred_region
        %s1063 = ssub.s32 %s12, 2
        // Predicated region
        $region64: #{_lambda_.1} parent=62 // pred_check
          %p1064 = pneg %p109
        $region65: #{_lambda_.1} parent=62 // pred_check_branch
          %1066 = sbr.rel (%p1064) target = $region67
        $region66: #{_lambda_.1} parent=62 // pred_region
          %s1067 = sand.u32 %s94, 1
          %s1068 = scalar_lea.sflag [#allocation4], %s1067
          %s1069 = sand.u32 %s94, 1
          %s1070 = smul.addr %s1069, 64
          %s1071 = scalar_lea.vmem [#allocation3], %s1070
          %1073 = dma.done %s1068, 1024
        $region67: #{_lambda_.1} parent=62 // pred_fallthru
          _
      $region63: #{_lambda_.1} parent=5 // pred_fallthru
        _
    $region6: #{_lambda_.1} parent=1 // loop_footer
      %s16 = sadd.s32 1, %s12
    $region7: #{_lambda_.1} parent=1 // loop_footer_branch
      %11 = sbr.rel target = $region3
    $region8: #{_lambda_.1} parent=1 // loop_exit
      _
    %1074 = vsyncpa [#allocation4], 1
    %s1075 = scalar_lea.sflag [#allocation4], 1
    %1076 = vsyncpa %s1075, 1

</llo_original>
